<compile_context>
chip_gen: v6e
topology: v6e:2x2x1
jax: 0.10.0
libtpu: 0.0.40
codegen_flags: <defaults>
</compile_context>

<pallas_src>
import jax
import jax.numpy as jnp
from jax.experimental import pallas as pl
from jax.experimental.pallas import tpu as pltpu


def _drop_path_kernel(scale_ref, x_ref, o_ref):
    # scale_ref: (TB, 1) f32 per-row scale (0.0 for dropped rows, 1/keep_prob
    #            for kept rows).
    # x_ref / o_ref: (TB, TC) lane-dense tiles.
    o_ref[...] = (x_ref[...] * scale_ref[...]).astype(o_ref.dtype)


def _round_up(v, m):
    return (v + m - 1) // m * m


def _pick_block(B, C, itemsize, target_bytes=4 << 20, db_budget_bytes=24 << 20):
    """Pick a lane-dense (TB, TC) block for a (B, C) array (cdiv tiling).

    - TC: multiple of 128 (or full C when C < 128), sized near target_bytes.
    - TB: multiple of the dtype-native sublane packing (or full B when small).
    - Double-buffered in+out footprint (~4*TB*TC*itemsize) clamped to budget.
    - If the grid would be a single program, split one axis so v7x's two
      TensorCores both get work.
    """
    # dtype-native sublane packing
    if itemsize >= 4:
        sub = 8
    elif itemsize == 2:
        sub = 16
    else:
        sub = 32

    # Column block: wide multiple of 128 near the byte target (assuming a
    # `sub`-row slab), never wider than C rounded up to 128.
    if C <= 128:
        tc = C
    else:
        cap = max(128, (target_bytes // (sub * itemsize)) // 128 * 128)
        tc = min(cap, _round_up(C, 128))

    # Row block: fill the remaining byte target, multiple of `sub`.
    if B <= sub:
        tb = B
    else:
        cap_rows = max(sub, (target_bytes // max(1, tc * itemsize)) // sub * sub)
        tb = min(cap_rows, _round_up(B, sub))

    # VMEM safety net: double-buffered in + out must fit the budget.
    while 4 * tb * tc * itemsize > db_budget_bytes:
        if tb > sub:
            tb = max(sub, _round_up(tb // 2, sub))
        elif tc > 128:
            tc = max(128, _round_up(tc // 2, 128))
        else:
            break

    # v7x megacore: guarantee >= 2 grid programs when the tensor allows it.
    if pl.cdiv(B, tb) * pl.cdiv(C, tc) < 2:
        if tc > 128:
            tc = max(128, _round_up(pl.cdiv(tc, 2), 128))
        elif tb > sub:
            tb = max(sub, _round_up(pl.cdiv(tb, 2), sub))

    return tb, tc


def drop_path(x, drop_prob, training, key):
    """Functional equivalent of the PyTorch drop_path / DropPath.forward."""
    if drop_prob is None or drop_prob == 0.0 or not training:
        return x
    keep_prob = 1.0 - float(drop_prob)

    B = x.shape[0]
    C = 1
    for d in x.shape[1:]:
        C *= d

    # Per-sample uniform draws -> binary mask -> f32 scale, all in the wrapper.
    # Same binarization as the PyTorch reference: floor(keep_prob + U[0,1)).
    rand = jax.random.uniform(key, (B, 1), dtype=jnp.float32)
    scale = jnp.floor(keep_prob + rand) * jnp.float32(1.0 / keep_prob)  # (B,1)

    x2 = x.reshape(B, C)
    itemsize = jnp.dtype(x.dtype).itemsize
    tb, tc = _pick_block(B, C, itemsize)
    grid = (pl.cdiv(B, tb), pl.cdiv(C, tc))

    out2 = pl.pallas_call(
        _drop_path_kernel,
        out_shape=jax.ShapeDtypeStruct((B, C), x.dtype),
        grid=grid,
        in_specs=[
            pl.BlockSpec((tb, 1), lambda i, j: (i, 0)),     # per-row scale
            pl.BlockSpec((tb, tc), lambda i, j: (i, j)),    # x tile
        ],
        out_specs=pl.BlockSpec((tb, tc), lambda i, j: (i, j)),
        compiler_params=pltpu.CompilerParams(
            dimension_semantics=("parallel", "parallel"),
            vmem_limit_bytes=32 << 20,
        ),
        cost_estimate=pl.CostEstimate(
            flops=B * C,
            transcendentals=0,
            bytes_accessed=2 * B * C * itemsize + B * 4,
        ),
    )(scale, x2)
    # TODO(synk): for large drop_prob, a manual-DMA variant (x in pl.ANY, keep
    # mask scalar-prefetched into SMEM, pl.when-guarded async copy + zero-fill
    # for dropped rows) could skip reading dropped rows from HBM entirely.
    return out2.reshape(x.shape)


class DropPath:
    """Drop paths (Stochastic Depth) per sample — JAX/Pallas version."""

    def __init__(self, drop_prob=None):
        self.drop_prob = drop_prob
        self.training = True  # mirror nn.Module default training mode

    def __call__(self, x, key):
        return drop_path(x, self.drop_prob, self.training, key)


if __name__ == "__main__":
    key = jax.random.PRNGKey(0)
    kx, kdrop = jax.random.split(key)

    B, L, D = 2, 8, 32
    x = jax.random.normal(kx, (B, L, D), dtype=jnp.float32)

    module = DropPath(drop_prob=0.3)
    out = jax.block_until_ready(module(x, kdrop))

    # Reference check (pure JAX, same semantics as the PyTorch drop_path).
    keep_prob = 1.0 - 0.3
    rand = jax.random.uniform(kdrop, (B, 1), dtype=jnp.float32)
    mask = jnp.floor(keep_prob + rand)  # (B,1) binary
    ref = x / keep_prob * mask[:, :, None]
    assert out.shape == x.shape and out.dtype == x.dtype
    assert jnp.allclose(out, ref, atol=1e-6, rtol=1e-6)

    # Ragged / non-divisor shape exercising the cdiv tail masking.
    xr = jax.random.normal(kx, (5, 7, 37), dtype=jnp.float32)
    out_r = jax.block_until_ready(module(xr, kdrop))
    rand_r = jax.random.uniform(kdrop, (5, 1), dtype=jnp.float32)
    mask_r = jnp.floor(keep_prob + rand_r)
    ref_r = xr / keep_prob * mask_r[:, :, None]
    assert out_r.shape == xr.shape
    assert jnp.allclose(out_r, ref_r, atol=1e-6, rtol=1e-6)

    # Eval mode / drop_prob=0 -> identity.
    module.training = False
    out_eval = jax.block_until_ready(module(x, kdrop))
    assert jnp.array_equal(out_eval, x)

    print("KERNEL_OK")
</pallas_src>

<mosaic_0001>
module attributes {stable_mosaic.version = 11 : i64} {
  func.func @_drop_path_kernel(%arg0: i32, %arg1: i32, %arg2: memref<2x1xf32, #tpu.memory_space<vmem>>, %arg3: memref<2x128xf32, #tpu.memory_space<vmem>>, %arg4: memref<2x128xf32, #tpu.memory_space<vmem>>) attributes {dimension_semantics = [#tpu.dimension_semantics<parallel>, #tpu.dimension_semantics<parallel>], iteration_bounds = array<i64: 1, 2>, scalar_prefetch = 0 : i64, scratch_operands = 0 : i64, tpu.core_type = #tpu.core_type<tc>, window_params = [{transform_indices = @transform_0, window_bounds = array<i64: 2, 1>}, {transform_indices = @transform_1, window_bounds = array<i64: 2, 128>}, {transform_indices = @transform_2, window_bounds = array<i64: 2, 128>}]} {
    %c0 = arith.constant 0 : index
    %c0_0 = arith.constant 0 : index
    %0 = vector.load %arg3[%c0, %c0_0] : memref<2x128xf32, #tpu.memory_space<vmem>>, vector<2x128xf32>
    %c0_1 = arith.constant 0 : index
    %c0_2 = arith.constant 0 : index
    %1 = vector.load %arg2[%c0_1, %c0_2] : memref<2x1xf32, #tpu.memory_space<vmem>>, vector<2x1xf32>
    %2 = vector.broadcast %1 : vector<2x1xf32> to vector<2x128xf32>
    %3 = arith.mulf %0, %2 : vector<2x128xf32>
    %c0_3 = arith.constant 0 : index
    %c0_4 = arith.constant 0 : index
    %4 = vector.load %arg4[%c0_3, %c0_4] : memref<2x128xf32, #tpu.memory_space<vmem>>, vector<2x128xf32>
    tpu.vector_store %arg4[%c0_3, %c0_4], %3 {strides = array<i32>} : memref<2x128xf32, #tpu.memory_space<vmem>>, vector<2x128xf32>,
    return
  }
  func.func @transform_0(%arg0: i32, %arg1: i32) -> (i32, i32) {
    %c0_i32 = arith.constant 0 : i32
    %c0_i32_0 = arith.constant 0 : i32
    return %arg0, %c0_i32 : i32, i32
  }
  func.func @transform_1(%arg0: i32, %arg1: i32) -> (i32, i32) {
    %c0_i32 = arith.constant 0 : i32
    return %arg0, %arg1 : i32, i32
  }
  func.func @transform_2(%arg0: i32, %arg1: i32) -> (i32, i32) {
    %c0_i32 = arith.constant 0 : i32
    return %arg0, %arg1 : i32, i32
  }
}

</mosaic_0001>

<llo_original>
// kernel: tpu_custom_call.1
$region0: #{tpu_custom_call.1}
  #allocation0 [shape = 'u32[]', space=smem, size = 0x4, offset = 0x4, fixed_abs, tag = 'smem constant byte address 0x4 - core index']
  #allocation1 [shape = 'u32[144,128]{1,0:T(1,128)}', space=vmem, size = 0x12000, scoped, tag = 'internal scratch']
  %s0 = inlined_call_operand.vmem [shape: f32[2,1], index: 0, kind: input, shape index: {}]
  %s1 = inlined_call_operand.vmem [shape: f32[2,256], index: 1, kind: input, shape index: {}]
  %s2 = inlined_call_operand.hbm [shape: f32[2,256], index: 2, kind: output, shape index: {}]
  %s3 = sld [smem:[#allocation0]]
  $region41: #{tpu_custom_call.1} parent=0
    _
  %s5 = ssub.s32 1, %s3
  %s6 = scalar_select 0, %s5, %s3
  $region1: #{tpu_custom_call.1} parent=0
    #allocation2 [shape = 'u8[2048]{0}', space=vmem, size = 0x800, scoped, tag = 'output window, operand 0']
    #allocation3 [shape = 's32[2]{0}', space=sflag, size = 0x8, scoped, tag = 'scoped memory for tpu_custom_call.1']
    %7 = vsyncpa [#allocation3], 0
    %s8 = scalar_lea.sflag [#allocation3], 1
    %9 = vsyncpa %s8, 0
    loop: start=0, step=1, limit=4
    $region2: #{tpu_custom_call.1} parent=1 // loop_pre_header
      _
    $region3: #{tpu_custom_call.1} parent=1 // loop_header
      %s11 = sphi 0, %s15
      %p12 = scmp.ge.s32.totalorder %s11, 4
      %s18 = sphi 0, %s30
      %s19 = sphi 0, %s26
      %s20 = sphi 0, %s18
      %s21 = sphi 0, %s19
      %s22 = sphi 0, %s20
      %s23 = sphi 0, %s21
      %s33 = sphi 0, %s35
      %s36 = sphi 0, %s33
      %s37 = sphi 0, %s36
      %s53 = sphi 0, %s37
      %s61 = sphi 0, %s63
      %s64 = sphi 0, %s61
      %s65 = sphi 0, %s64
      %s81 = sphi 0, %s65
      %s89 = sphi 0, %s91
      %s92 = sphi 0, %s89
      %s93 = sphi 0, %s92
      %s109 = sphi 0, %s93
    $region4: #{tpu_custom_call.1} parent=1 // loop_header_branch
      %14 = sbr.rel (%p12) target = $region8
    $region5: #{tpu_custom_call.1} parent=1 // loop_body
      %s16 = ssub.s32 %s11, 1
      %s17 = ssub.s32 %s11, 2
      %s24 = sadd.s32 1, %s19
      %p25 = scmp.ge.s32.totalorder %s24, 2
      %s26 = scalar_select %p25, 0, %s24
      %s27 = sadd.s32 1, %s18
      %s28 = scalar_select %p25, %s27, %s18
      %p29 = scmp.ge.s32.totalorder %s28, 1
      %s30 = scalar_select %p29, 0, %s28
      %s31 = ssub.s32 %s18, %s30
      %p32 = scmp.eq.s32.totalorder %s31, 0
      %s34 = sadd.s32 %s33, 1
      %s35 = scalar_select %p32, %s33, %s34
      %p38 = pneg %p32
      %p39 = scmp.eq.s32.totalorder %s11, 1
      %p40 = por %p38, %p39
      %p41 = scmp.ne.s32.totalorder %s33, %s36
      %p42 = scmp.eq.s32.totalorder %s11, 0
      %p43 = por %p41, %p42
      %p44 = scmp.ne.s32.totalorder %s33, %s36
      %p45 = scmp.eq.s32.totalorder %s16, 1
      %p46 = por %p44, %p45
      %p47 = scmp.ne.s32.totalorder %s36, %s37
      %p48 = scmp.eq.s32.totalorder %s16, 0
      %p49 = por %p47, %p48
      %p50 = scmp.ne.s32.totalorder %s36, %s37
      %p51 = scmp.eq.s32.totalorder %s17, 1
      %p52 = por %p50, %p51
      %p54 = scmp.ne.s32.totalorder %s37, %s53
      %p55 = scmp.eq.s32.totalorder %s17, 0
      %p56 = por %p54, %p55
      %s57 = ssub.s32 %s18, %s30
      %s58 = ssub.s32 %s19, %s26
      %s59 = sor.u32 %s57, %s58
      %p60 = scmp.eq.s32.totalorder %s59, 0
      %s62 = sadd.s32 %s61, 1
      %s63 = scalar_select %p60, %s61, %s62
      %p66 = pneg %p60
      %p67 = scmp.eq.s32.totalorder %s11, 1
      %p68 = por %p66, %p67
      %p69 = scmp.ne.s32.totalorder %s61, %s64
      %p70 = scmp.eq.s32.totalorder %s11, 0
      %p71 = por %p69, %p70
      %p72 = scmp.ne.s32.totalorder %s61, %s64
      %p73 = scmp.eq.s32.totalorder %s16, 1
      %p74 = por %p72, %p73
      %p75 = scmp.ne.s32.totalorder %s64, %s65
      %p76 = scmp.eq.s32.totalorder %s16, 0
      %p77 = por %p75, %p76
      %p78 = scmp.ne.s32.totalorder %s64, %s65
      %p79 = scmp.eq.s32.totalorder %s17, 1
      %p80 = por %p78, %p79
      %p82 = scmp.ne.s32.totalorder %s65, %s81
      %p83 = scmp.eq.s32.totalorder %s17, 0
      %p84 = por %p82, %p83
      %s85 = ssub.s32 %s18, %s30
      %s86 = ssub.s32 %s19, %s26
      %s87 = sor.u32 %s85, %s86
      %p88 = scmp.eq.s32.totalorder %s87, 0
      %s90 = sadd.s32 %s89, 1
      %s91 = scalar_select %p88, %s89, %s90
      %p94 = pneg %p88
      %p95 = scmp.eq.s32.totalorder %s11, 1
      %p96 = por %p94, %p95
      %p97 = scmp.ne.s32.totalorder %s89, %s92
      %p98 = scmp.eq.s32.totalorder %s11, 0
      %p99 = por %p97, %p98
      %p100 = scmp.ne.s32.totalorder %s89, %s92
      %p101 = scmp.eq.s32.totalorder %s16, 1
      %p102 = por %p100, %p101
      %p103 = scmp.ne.s32.totalorder %s92, %s93
      %p104 = scmp.eq.s32.totalorder %s16, 0
      %p105 = por %p103, %p104
      %p106 = scmp.ne.s32.totalorder %s92, %s93
      %p107 = scmp.eq.s32.totalorder %s17, 1
      %p108 = por %p106, %p107
      %p110 = scmp.ne.s32.totalorder %s93, %s109
      %p111 = scmp.eq.s32.totalorder %s17, 0
      %p112 = por %p110, %p111
      %p113 = scmp.le.s32.totalorder 1, %s11
      %p114 = scmp.lt.s32.totalorder %s11, 3
      %p115 = pnand %p113, %p114
      %p116 = pneg %p115
      // Predicated region
      $region9: #{tpu_custom_call.1} parent=5 // pred_check
        _
      $region10: #{tpu_custom_call.1} parent=5 // pred_check_branch
        %118 = sbr.rel (%p115) target = $region12
      $region11: #{tpu_custom_call.1} parent=5 // pred_region
        %s119 = ssub.s32 %s11, 1
        // Predicated region
        $region13: #{tpu_custom_call.1} parent=11 // pred_check
          %p120 = pneg %p49
        $region14: #{tpu_custom_call.1} parent=11 // pred_check_branch
          %122 = sbr.rel (%p120) target = $region16
        $region15: #{tpu_custom_call.1} parent=11 // pred_region
          %p123 = scmp.lt.s32.totalorder %s20, 0
          %s124 = scalar_select %p123, %s20, 0
          %s125 = smul.addr %s124, 2
          %s126 = scalar_lea.vmem %s0, %s125
        $region16: #{tpu_custom_call.1} parent=11 // pred_fallthru
          _
      $region12: #{tpu_custom_call.1} parent=5 // pred_fallthru
        _
      %p127 = scmp.lt.s32.totalorder %s11, 2
      // Predicated region
      $region17: #{tpu_custom_call.1} parent=5 // pred_check
        %p128 = pneg %p127
      $region18: #{tpu_custom_call.1} parent=5 // pred_check_branch
        %130 = sbr.rel (%p128) target = $region20
      $region19: #{tpu_custom_call.1} parent=5 // pred_region
        // Predicated region
        $region21: #{tpu_custom_call.1} parent=19 // pred_check
          %p131 = pneg %p71
        $region22: #{tpu_custom_call.1} parent=19 // pred_check_branch
          %133 = sbr.rel (%p131) target = $region24
        $region23: #{tpu_custom_call.1} parent=19 // pred_region
          %p134 = scmp.lt.s32.totalorder %s18, 0
          %s135 = scalar_select %p134, %s18, 0
          %p136 = scmp.lt.s32.totalorder %s19, 1
          %s137 = scalar_select %p136, %s19, 1
          %s138 = smul.addr %s135, 2
          %s139 = sadd.s32 %s137, %s138
          %s140 = smul.addr %s139, 2
          %s141 = scalar_lea.vmem %s1, %s140
        $region24: #{tpu_custom_call.1} parent=19 // pred_fallthru
          _
      $region20: #{tpu_custom_call.1} parent=5 // pred_fallthru
        _
      %p142 = scmp.le.s32.totalorder 1, %s11
      %p143 = scmp.lt.s32.totalorder %s11, 3
      %p144 = pnand %p142, %p143
      %p145 = pneg %p144
      // Predicated region
      $region25: #{tpu_custom_call.1} parent=5 // pred_check
        _
      $region26: #{tpu_custom_call.1} parent=5 // pred_check_branch
        %147 = sbr.rel (%p144) target = $region28
      $region27: #{tpu_custom_call.1} parent=5 // pred_region
        %s148 = ssub.s32 %s11, 1
        %p149 = scmp.lt.s32.totalorder %s20, 0
        %s150 = scalar_select %p149, %s20, 0
        %s151 = smul.addr %s150, 2
        %s152 = scalar_lea.vmem %s0, %s151
        %p153 = pneg %p49
        %p154 = pneg %p46
        %p155 = scmp.lt.s32.totalorder %s20, 0
        %s156 = scalar_select %p155, %s20, 0
        %p157 = scmp.lt.s32.totalorder %s21, 1
        %s158 = scalar_select %p157, %s21, 1
        %s159 = smul.addr %s156, 2
        %s160 = sadd.s32 %s158, %s159
        %s161 = smul.addr %s160, 2
        %s162 = scalar_lea.vmem %s1, %s161
        %p163 = pneg %p77
        %p164 = pneg %p74
        %p165 = pneg %p105
        %p166 = pneg %p102
        %s167 = sand.u32 %s92, 1
        %s168 = scalar_lea.sflag [#allocation3], %s167
        %s169 = sand.u32 %s92, 1
        %s170 = smul.addr %s169, 2
        %s171 = scalar_lea.vmem [#allocation2], %s170
        %p172 = scmp.lt.s32.totalorder %s20, 0
        %s173 = scalar_select %p172, %s20, 0
        %s174 = smul.addr %s173, 2
        %s175 = scalar_lea.vmem %s0, %s174
        %p176 = scmp.lt.s32.totalorder %s20, 0
        %s177 = scalar_select %p176, %s20, 0
        %p178 = scmp.lt.s32.totalorder %s21, 1
        %s179 = scalar_select %p178, %s21, 1
        %s180 = smul.addr %s177, 2
        %s181 = sadd.s32 %s179, %s180
        %s182 = smul.addr %s181, 2
        %s183 = scalar_lea.vmem %s1, %s182
        %v184 = vld [vmem:[%s183] sm:$0x3]
        %v185 = vld [vmem:[%s175] sm:$0x3]
        %187 = vset.pattern.permute.xlu0 0
        %188 = vperm.xlu0 %187, %v185
        %v189 = vpop.permute.xlu0 %188
        %v191 = vmul.f32 %v184, %v189
        %192 = vst [vmem:[%s171] sm:$0x3] %v191
        %s193 = sand.u32 %s92, 1
        %s194 = scalar_lea.sflag [#allocation3], %s193
        %s195 = sand.u32 %s92, 1
        %s196 = smul.addr %s195, 2
        %s197 = scalar_lea.vmem [#allocation2], %s196
        // Predicated region
        $region29: #{tpu_custom_call.1} parent=27 // pred_check
          %p198 = pneg %p102
        $region30: #{tpu_custom_call.1} parent=27 // pred_check_branch
          %200 = sbr.rel (%p198) target = $region32
        $region31: #{tpu_custom_call.1} parent=27 // pred_region
          %s202 = ssub.s32 32, 32
          %203 = vsyncadd %s194, %s202
          %s204 = smul.addr %s20, 2
          %s205 = sadd.s32 %s21, %s204
          %s206 = smul.addr %s205, 32
          %s207 = scalar_lea.hbm %s2, %s206
          %s209 = sshll.u32 %s197, 4
          %s210 = int_to_ptr.vmem [resolvable:$true] %s209
          %212 = dma.vmem_to_hbm [thread:$0]  %s210, 32, %s207, %s194
        $region32: #{tpu_custom_call.1} parent=27 // pred_fallthru
          _
      $region28: #{tpu_custom_call.1} parent=5 // pred_fallthru
        _
      %p213 = scmp.le.s32.totalorder 2, %s11
      // Predicated region
      $region33: #{tpu_custom_call.1} parent=5 // pred_check
        %p214 = pneg %p213
      $region34: #{tpu_custom_call.1} parent=5 // pred_check_branch
        %216 = sbr.rel (%p214) target = $region36
      $region35: #{tpu_custom_call.1} parent=5 // pred_region
        %s217 = ssub.s32 %s11, 2
        // Predicated region
        $region37: #{tpu_custom_call.1} parent=35 // pred_check
          %p218 = pneg %p108
        $region38: #{tpu_custom_call.1} parent=35 // pred_check_branch
          %220 = sbr.rel (%p218) target = $region40
        $region39: #{tpu_custom_call.1} parent=35 // pred_region
          %s221 = sand.u32 %s93, 1
          %s222 = scalar_lea.sflag [#allocation3], %s221
          %s223 = sand.u32 %s93, 1
          %s224 = smul.addr %s223, 2
          %s225 = scalar_lea.vmem [#allocation2], %s224
          %226 = dma.done %s222, 32
        $region40: #{tpu_custom_call.1} parent=35 // pred_fallthru
          _
      $region36: #{tpu_custom_call.1} parent=5 // pred_fallthru
        _
    $region6: #{tpu_custom_call.1} parent=1 // loop_footer
      %s15 = sadd.s32 1, %s11
    $region7: #{tpu_custom_call.1} parent=1 // loop_footer_branch
      %10 = sbr.rel target = $region3
    $region8: #{tpu_custom_call.1} parent=1 // loop_exit
      _
    %227 = vsyncpa [#allocation3], 1
    %s228 = scalar_lea.sflag [#allocation3], 1
    %229 = vsyncpa %s228, 1

</llo_original>
